<compile_context>
chip_gen: v7x
topology: tpu7x:2x2x1
jax: 0.10.0
libtpu: 0.0.40
codegen_flags: <defaults>
</compile_context>

<pallas_src>
import functools

import jax
import jax.numpy as jnp
from jax import lax
from jax.experimental import pallas as pl
from jax.experimental.pallas import tpu as pltpu

_EPS = 1e-5
_LANE = 128
_TILE_TARGET = 2048   # lanes per grid step; conservative for v7x's 64 MiB VMEM


def _round_up(n, m):
    return ((n + m - 1) // m) * m


def _fold_bn(gamma, beta, mean, var, eps=_EPS):
    scale = (gamma / jnp.sqrt(var + eps)).astype(jnp.float32)
    bias = (beta - mean * scale).astype(jnp.float32)
    return scale, bias


def _stack_w(w, scale):
    """w: (C_out, C_in, 3) f32 conv weight; fold BN scale in f32, stack the 3
    taps along the contraction axis -> (C_out, 3*C_in), cast bf16 last
    (single rounding).  Column k = t*C_in + c holds scale[o]*w[o, c, t]."""
    c_out, c_in, _ = w.shape
    wf = w * scale[:, None, None]
    return jnp.transpose(wf, (0, 2, 1)).reshape(c_out, 3 * c_in).astype(jnp.bfloat16)


def _basic_block_kernel(*refs, seg, stride1, projection):
    it = iter(refs)
    x_ref = next(it)      # stride1: (C_in, T) bf16 ; else: (3*C_in, T) bf16 conv1 taps
    w1_ref = next(it)     # (C_out, 3*C_in)  bf16 (bn1 scale folded in)
    b1_ref = next(it)     # (C_out, 1) f32
    w2_ref = next(it)     # (C_out, 3*C_out) bf16 (bn2 scale folded in)
    b2_ref = next(it)     # (C_out, 1) f32 (+ shortcut BN bias when projecting)
    wsc_ref = next(it) if projection else None  # (C_out, 3*C_in) bf16, zero-padded stacked
    out_ref = next(it)    # (C_out, T) f32

    T = out_ref.shape[-1]
    dot = functools.partial(jnp.dot, preferred_element_type=jnp.float32)

    # Segment-boundary lane masks, computed once per grid step on a (1, T) tile
    # and shared by both tap constructions.  T is a multiple of seg, so the
    # local lane index modulo seg equals the global in-segment position.
    pos = lax.broadcasted_iota(jnp.int32, (1, T), 1) % seg
    has_l = (pos > 0).astype(jnp.float32)            # has a left neighbor in-segment
    has_r = (pos < seg - 1).astype(jnp.float32)      # has a right neighbor in-segment

    def stacked_taps(y):
        """y: (C, T) f32 -> (3C, T) f32 stacked [left, mid, right] conv operand.
        Shifts run on the XLU (pltpu.roll); segment edges are zeroed."""
        lft = pltpu.roll(y, 1, 1) * has_l             # y[:, j-1]
        rgt = pltpu.roll(y, T - 1, 1) * has_r         # y[:, j+1]
        return jnp.concatenate([lft, y, rgt], axis=0)

    # ---- conv1 (k=3, pad=1) + bn1 + ReLU : one stacked-K matmul -------------
    if stride1:
        xf = x_ref[...].astype(jnp.float32)           # also the residual input
        x1 = stacked_taps(xf).astype(jnp.bfloat16)    # middle block == x (bf16)
    else:
        x1 = x_ref[...]                               # taps prebuilt host-side (strided)
    out1 = jnp.maximum(dot(w1_ref[...], x1) + b1_ref[...], 0.0)   # f32 (C_out, T)

    # ---- conv2 (k=3, stride=1, pad=1) + bn2 : one stacked-K matmul ----------
    out2 = dot(w2_ref[...], stacked_taps(out1).astype(jnp.bfloat16)) + b2_ref[...]

    # ---- shortcut + residual add + ReLU -------------------------------------
    if projection:
        # wsc is stacked/zero-padded so it picks out x1's middle block, which is
        # exactly x (stride=1) or x[:, ::stride] (strided path).
        out2 += dot(wsc_ref[...], x1)
    else:
        out2 += xf                                    # identity residual
    out_ref[...] = jnp.maximum(out2, 0.0).astype(out_ref.dtype)


def basic_block_pallas(x, params, stride):
    """Pallas forward of BasicBlock.  x: (B, C_in, L) float32 (NCL layout)."""
    B, C_in, L = x.shape
    C_out = params["w1"].shape[0]
    L_out = (L + 2 - 3) // stride + 1
    N_out = B * L_out
    seg = L_out
    stride1 = stride == 1
    projection = (stride != 1) or (C_in != C_out)

    # ---- host-side glue: fold BN into weights (f32 first), stack conv taps --
    s1, b1 = _fold_bn(*params["bn1"])
    s2, b2 = _fold_bn(*params["bn2"])
    w1s = _stack_w(params["w1"], s1)                   # (C_out, 3*C_in)  bf16
    w2s = _stack_w(params["w2"], s2)                   # (C_out, 3*C_out) bf16
    b1c = b1.reshape(-1, 1)
    if projection:
        ssc, bsc = _fold_bn(*params["bn_sc"])
        b2c = (b2 + bsc).reshape(-1, 1)                # shortcut BN bias folded into bn2
        wsc = params["wsc"][:, :, 0] * ssc[:, None]    # (C_out, C_in) f32, scale folded
        wsc_s = (jnp.zeros((C_out, 3 * C_in), jnp.float32)
                 .at[:, C_in:2 * C_in].set(wsc).astype(jnp.bfloat16))
    else:
        b2c = b2.reshape(-1, 1)

    # ---- lane tiling: tiles must be a multiple of 128 AND of seg ------------
    unit = seg
    while unit % _LANE:                                # smallest seg-multiple that is lane-dense
        unit += seg
    n_units = pl.cdiv(N_out, unit)
    T = unit * max(1, min(_TILE_TARGET // unit, n_units))
    Np = _round_up(N_out, T)
    grid = (Np // T,)

    if stride1:
        x_in = jnp.transpose(x, (1, 0, 2)).reshape(C_in, N_out)
        x_rows = C_in
    else:
        # strided conv1 taps gathered host-side, already stacked on the
        # contraction axis: (3*C_in, B*L_out); rows [C_in, 2*C_in) == x[:, ::stride].
        x_pad = jnp.pad(x, ((0, 0), (0, 0), (1, 1)))
        idx = jnp.arange(L_out)[None, :] * stride + jnp.arange(3)[:, None]  # (3, L_out)
        x_in = jnp.transpose(x_pad[:, :, idx], (2, 1, 0, 3)).reshape(3 * C_in, N_out)
        x_rows = 3 * C_in
    x_in = jnp.pad(x_in, ((0, 0), (0, Np - N_out))).astype(jnp.bfloat16)

    vec_spec = pl.BlockSpec((C_out, 1), lambda i: (0, 0))
    inputs = [x_in, w1s, b1c, w2s, b2c]
    in_specs = [pl.BlockSpec((x_rows, T), lambda i: (0, i)),
                pl.BlockSpec((C_out, 3 * C_in), lambda i: (0, 0)),
                vec_spec,
                pl.BlockSpec((C_out, 3 * C_out), lambda i: (0, 0)),
                vec_spec]
    if projection:
        inputs.append(wsc_s)
        in_specs.append(pl.BlockSpec((C_out, 3 * C_in), lambda i: (0, 0)))

    # VMEM budget with headroom: double-buffered x/out tiles + live f32
    # intermediates + resident weights.  Clamped so it is safe on v7x (64 MiB).
    per_step = (2 * x_rows * T * 2            # double-buffered bf16 input tile
                + 2 * C_out * T * 4           # double-buffered f32 output tile
                + (3 * C_in + 7 * C_out) * T * 4)   # live tap / out1 / out2 intermediates
    w_bytes = (3 * C_in + 3 * C_out + (3 * C_in if projection else 0)) * C_out * 2 * 2
    vmem_limit = int(min(max(2 * (per_step + w_bytes), 16 << 20), 48 << 20))

    kernel = functools.partial(_basic_block_kernel, seg=seg,
                               stride1=stride1, projection=projection)

    out_flat = pl.pallas_call(
        kernel,
        out_shape=jax.ShapeDtypeStruct((C_out, Np), jnp.float32),
        grid=grid,
        in_specs=in_specs,
        out_specs=pl.BlockSpec((C_out, T), lambda i: (0, i)),
        compiler_params=pltpu.CompilerParams(
            dimension_semantics=("parallel",),      # v7x: lane blocks shard across 2 TCs
            vmem_limit_bytes=vmem_limit),
    )(*inputs)

    # unfold lanes back to (B, C_out, L_out)
    out = out_flat[:, :N_out].reshape(C_out, B, L_out)
    return jnp.transpose(out, (1, 0, 2))


# ------------------------- reference (plain JAX) -------------------------- #
def _bn_ref(y, bn):
    gamma, beta, mean, var = bn
    return (y - mean[None, :, None]) / jnp.sqrt(var[None, :, None] + _EPS) \
        * gamma[None, :, None] + beta[None, :, None]


def basic_block_reference(x, params, stride):
    dn = ("NCH", "OIH", "NCH")
    hp = lax.Precision.HIGHEST
    out = lax.conv_general_dilated(x, params["w1"], (stride,), [(1, 1)],
                                   dimension_numbers=dn, precision=hp)
    out = jax.nn.relu(_bn_ref(out, params["bn1"]))
    out = lax.conv_general_dilated(out, params["w2"], (1,), [(1, 1)],
                                   dimension_numbers=dn, precision=hp)
    out = _bn_ref(out, params["bn2"])
    C_in, C_out = x.shape[1], params["w1"].shape[0]
    if stride != 1 or C_in != C_out:
        sc = lax.conv_general_dilated(x, params["wsc"], (stride,), [(0, 0)],
                                      dimension_numbers=dn, precision=hp)
        sc = _bn_ref(sc, params["bn_sc"])
    else:
        sc = x
    return jax.nn.relu(out + sc)


# ----------------------------- param init --------------------------------- #
def make_params(key, c_in, c_out):
    ks = jax.random.split(key, 6)

    def bn(k):
        k0, k1, k2, k3 = jax.random.split(k, 4)
        gamma = 1.0 + 0.1 * jax.random.normal(k0, (c_out,), jnp.float32)
        beta = 0.1 * jax.random.normal(k1, (c_out,), jnp.float32)
        mean = 0.1 * jax.random.normal(k2, (c_out,), jnp.float32)
        var = 1.0 + 0.1 * jax.random.uniform(k3, (c_out,), jnp.float32)
        return (gamma, beta, mean, var)

    return {
        "w1": 0.3 * jax.random.normal(ks[0], (c_out, c_in, 3), jnp.float32),
        "bn1": bn(ks[1]),
        "w2": 0.3 * jax.random.normal(ks[2], (c_out, c_out, 3), jnp.float32),
        "bn2": bn(ks[3]),
        "wsc": 0.3 * jax.random.normal(ks[4], (c_out, c_in, 1), jnp.float32),
        "bn_sc": bn(ks[5]),
    }


if __name__ == "__main__":
    root = jax.random.PRNGKey(0)
    k_pA, k_xA, k_pB, k_xB, k_pC, k_xC = jax.random.split(root, 6)
    B, L = 2, 16
    # bf16 MXU operands / bf16 x (f32 accumulate) -> looser tolerance vs f32 ref
    RTOL = ATOL = 5e-2

    # Case A: projection shortcut with stride (stride=2, 4 -> 8 channels)
    params_a = make_params(k_pA, 4, 8)
    x_a = jax.random.normal(k_xA, (B, 4, L), jnp.float32)
    out_a = jax.block_until_ready(basic_block_pallas(x_a, params_a, 2))
    ref_a = basic_block_reference(x_a, params_a, 2)
    assert out_a.shape == (B, 8, 8)
    assert jnp.allclose(out_a, ref_a, rtol=RTOL, atol=ATOL), "case A mismatch"

    # Case B: identity shortcut (stride=1, 8 -> 8 channels)
    params_b = make_params(k_pB, 8, 8)
    x_b = jax.random.normal(k_xB, (B, 8, L), jnp.float32)
    out_b = jax.block_until_ready(basic_block_pallas(x_b, params_b, 1))
    ref_b = basic_block_reference(x_b, params_b, 1)
    assert out_b.shape == (B, 8, L)
    assert jnp.allclose(out_b, ref_b, rtol=RTOL, atol=ATOL), "case B mismatch"

    # Case C: projection shortcut without stride (stride=1, 8 -> 16 channels)
    params_c = make_params(k_pC, 8, 16)
    x_c = jax.random.normal(k_xC, (B, 8, L), jnp.float32)
    out_c = jax.block_until_ready(basic_block_pallas(x_c, params_c, 1))
    ref_c = basic_block_reference(x_c, params_c, 1)
    assert out_c.shape == (B, 16, L)
    assert jnp.allclose(out_c, ref_c, rtol=RTOL, atol=ATOL), "case C mismatch"

    print("KERNEL_OK")
</pallas_src>

<mosaic_0001>
module attributes {stable_mosaic.version = 11 : i64} {
  func.func @_basic_block_kernel(%arg0: i32, %arg1: memref<12x128xbf16, #tpu.memory_space<vmem>>, %arg2: memref<8x12xbf16, #tpu.memory_space<vmem>>, %arg3: memref<8x1xf32, #tpu.memory_space<vmem>>, %arg4: memref<8x24xbf16, #tpu.memory_space<vmem>>, %arg5: memref<8x1xf32, #tpu.memory_space<vmem>>, %arg6: memref<8x12xbf16, #tpu.memory_space<vmem>>, %arg7: memref<8x128xf32, #tpu.memory_space<vmem>>) attributes {dimension_semantics = [#tpu.dimension_semantics<parallel>], iteration_bounds = array<i64: 1>, scalar_prefetch = 0 : i64, scratch_operands = 0 : i64, tpu.core_type = #tpu.core_type<tc>, window_params = [{transform_indices = @transform_0, window_bounds = array<i64: 12, 128>}, {pipeline_mode = #tpu.pipeline_mode<synchronous>, transform_indices = @transform_1, window_bounds = array<i64: 8, 12>}, {pipeline_mode = #tpu.pipeline_mode<synchronous>, transform_indices = @transform_2, window_bounds = array<i64: 8, 1>}, {pipeline_mode = #tpu.pipeline_mode<synchronous>, transform_indices = @transform_3, window_bounds = array<i64: 8, 24>}, {pipeline_mode = #tpu.pipeline_mode<synchronous>, transform_indices = @transform_4, window_bounds = array<i64: 8, 1>}, {pipeline_mode = #tpu.pipeline_mode<synchronous>, transform_indices = @transform_5, window_bounds = array<i64: 8, 12>}, {transform_indices = @transform_6, window_bounds = array<i64: 8, 128>}]} {
    %0 = tpu.iota {dimensions = array<i32: 1>} : vector<1x128xi32>
    %c8_i32 = arith.constant 8 : i32
    %c0_i32 = arith.constant 0 : i32
    %1 = arith.cmpi eq, %c8_i32, %c0_i32 : i32
    %c1_i32 = arith.constant 1 : i32
    %2 = arith.select %1, %c1_i32, %c8_i32 : i32
    %3 = vector.broadcast %2 : i32 to vector<1x128xi32>
    %4 = arith.remsi %0, %3 : vector<1x128xi32>
    %c0_i32_0 = arith.constant 0 : i32
    %5 = vector.broadcast %c0_i32_0 : i32 to vector<1x128xi32>
    %6 = arith.cmpi ne, %4, %5 : vector<1x128xi32>
    %c0_i32_1 = arith.constant 0 : i32
    %7 = vector.broadcast %c0_i32_1 : i32 to vector<1x128xi32>
    %8 = arith.cmpi slt, %4, %7 : vector<1x128xi32>
    %c0_i32_2 = arith.constant 0 : i32
    %9 = arith.cmpi slt, %2, %c0_i32_2 : i32
    %10 = vector.broadcast %9 : i1 to vector<1x128xi1>
    %11 = vector.broadcast %10 : vector<1x128xi1> to vector<1x128xi1>
    %12 = arith.xori %8, %11 : vector<1x128xi1>
    %13 = arith.andi %12, %6 : vector<1x128xi1>
    %14 = vector.broadcast %2 : i32 to vector<1x128xi32>
    %15 = arith.addi %4, %14 : vector<1x128xi32>
    %16 = arith.select %13, %15, %4 : vector<1x128xi1>, vector<1x128xi32>
    %c0_i32_3 = arith.constant 0 : i32
    %17 = vector.broadcast %c0_i32_3 : i32 to vector<1x128xi32>
    %18 = arith.cmpi sgt, %16, %17 : vector<1x128xi32>
    %19 = arith.extui %18 : vector<1x128xi1> to vector<1x128xi32>
    %20 = arith.sitofp %19 : vector<1x128xi32> to vector<1x128xf32>
    %c7_i32 = arith.constant 7 : i32
    %21 = vector.broadcast %c7_i32 : i32 to vector<1x128xi32>
    %22 = arith.cmpi slt, %16, %21 : vector<1x128xi32>
    %23 = arith.extui %22 : vector<1x128xi1> to vector<1x128xi32>
    %24 = arith.sitofp %23 : vector<1x128xi32> to vector<1x128xf32>
    %c0 = arith.constant 0 : index
    %c0_4 = arith.constant 0 : index
    %25 = vector.load %arg1[%c0, %c0_4] : memref<12x128xbf16, #tpu.memory_space<vmem>>, vector<12x128xbf16>
    %c0_5 = arith.constant 0 : index
    %c0_6 = arith.constant 0 : index
    %26 = vector.load %arg2[%c0_5, %c0_6] : memref<8x12xbf16, #tpu.memory_space<vmem>>, vector<8x12xbf16>
    %cst = arith.constant dense<0.000000e+00> : vector<8x128xf32>
    %27 = tpu.matmul %26, %25, %cst {dimension_numbers = #tpu.dot_dimension_numbers<[1], [0], [0], [1], [0, 0, 1, 1], [], []>} : vector<8x12xbf16>, vector<12x128xbf16>, vector<8x128xf32> -> vector<8x128xf32>
    %c0_7 = arith.constant 0 : index
    %c0_8 = arith.constant 0 : index
    %28 = vector.load %arg3[%c0_7, %c0_8] : memref<8x1xf32, #tpu.memory_space<vmem>>, vector<8x1xf32>
    %29 = vector.broadcast %28 : vector<8x1xf32> to vector<8x128xf32>
    %30 = arith.addf %27, %29 : vector<8x128xf32>
    %cst_9 = arith.constant 0.000000e+00 : f32
    %31 = vector.broadcast %cst_9 : f32 to vector<8x128xf32>
    %32 = arith.maximumf %30, %31 : vector<8x128xf32>
    %c0_10 = arith.constant 0 : index
    %c0_11 = arith.constant 0 : index
    %33 = vector.load %arg4[%c0_10, %c0_11] : memref<8x24xbf16, #tpu.memory_space<vmem>>, vector<8x24xbf16>
    %c1_i32_12 = arith.constant 1 : i32
    %34 = tpu.dynamic_rotate %32 by %c1_i32_12 dim 1 : vector<8x128xf32>, i32 -> vector<8x128xf32>
    %35 = vector.broadcast %20 : vector<1x128xf32> to vector<8x128xf32>
    %36 = arith.mulf %34, %35 : vector<8x128xf32>
    %c127_i32 = arith.constant 127 : i32
    %37 = tpu.dynamic_rotate %32 by %c127_i32 dim 1 : vector<8x128xf32>, i32 -> vector<8x128xf32>
    %38 = vector.broadcast %24 : vector<1x128xf32> to vector<8x128xf32>
    %39 = arith.mulf %37, %38 : vector<8x128xf32>
    %40 = tpu.concatenate %36, %32, %39 in 0 : vector<8x128xf32>, vector<8x128xf32>, vector<8x128xf32> -> vector<24x128xf32>
    %41 = arith.truncf %40 : vector<24x128xf32> to vector<24x128xbf16>
    %cst_13 = arith.constant dense<0.000000e+00> : vector<8x128xf32>
    %42 = tpu.matmul %33, %41, %cst_13 {dimension_numbers = #tpu.dot_dimension_numbers<[1], [0], [0], [1], [0, 0, 1, 1], [], []>} : vector<8x24xbf16>, vector<24x128xbf16>, vector<8x128xf32> -> vector<8x128xf32>
    %c0_14 = arith.constant 0 : index
    %c0_15 = arith.constant 0 : index
    %43 = vector.load %arg5[%c0_14, %c0_15] : memref<8x1xf32, #tpu.memory_space<vmem>>, vector<8x1xf32>
    %44 = vector.broadcast %43 : vector<8x1xf32> to vector<8x128xf32>
    %45 = arith.addf %42, %44 : vector<8x128xf32>
    %c0_16 = arith.constant 0 : index
    %c0_17 = arith.constant 0 : index
    %46 = vector.load %arg6[%c0_16, %c0_17] : memref<8x12xbf16, #tpu.memory_space<vmem>>, vector<8x12xbf16>
    %cst_18 = arith.constant dense<0.000000e+00> : vector<8x128xf32>
    %47 = tpu.matmul %46, %25, %cst_18 {dimension_numbers = #tpu.dot_dimension_numbers<[1], [0], [0], [1], [0, 0, 1, 1], [], []>} : vector<8x12xbf16>, vector<12x128xbf16>, vector<8x128xf32> -> vector<8x128xf32>
    %48 = arith.addf %45, %47 : vector<8x128xf32>
    %cst_19 = arith.constant 0.000000e+00 : f32
    %49 = vector.broadcast %cst_19 : f32 to vector<8x128xf32>
    %50 = arith.maximumf %48, %49 : vector<8x128xf32>
    %c0_20 = arith.constant 0 : index
    %c0_21 = arith.constant 0 : index
    %51 = vector.load %arg7[%c0_20, %c0_21] : memref<8x128xf32, #tpu.memory_space<vmem>>, vector<8x128xf32>
    tpu.vector_store %arg7[%c0_20, %c0_21], %50 {strides = array<i32>} : memref<8x128xf32, #tpu.memory_space<vmem>>, vector<8x128xf32>,
    return
  }
  func.func @transform_0(%arg0: i32) -> (i32, i32) {
    %c0_i32 = arith.constant 0 : i32
    %c0_i32_0 = arith.constant 0 : i32
    return %c0_i32, %arg0 : i32, i32
  }
  func.func @transform_1(%arg0: i32) -> (i32, i32) {
    %c0_i32 = arith.constant 0 : i32
    %c0_i32_0 = arith.constant 0 : i32
    %c0_i32_1 = arith.constant 0 : i32
    return %c0_i32, %c0_i32_0 : i32, i32
  }
  func.func @transform_2(%arg0: i32) -> (i32, i32) {
    %c0_i32 = arith.constant 0 : i32
    %c0_i32_0 = arith.constant 0 : i32
    %c0_i32_1 = arith.constant 0 : i32
    return %c0_i32, %c0_i32_0 : i32, i32
  }
  func.func @transform_3(%arg0: i32) -> (i32, i32) {
    %c0_i32 = arith.constant 0 : i32
    %c0_i32_0 = arith.constant 0 : i32
    %c0_i32_1 = arith.constant 0 : i32
    return %c0_i32, %c0_i32_0 : i32, i32
  }
  func.func @transform_4(%arg0: i32) -> (i32, i32) {
    %c0_i32 = arith.constant 0 : i32
    %c0_i32_0 = arith.constant 0 : i32
    %c0_i32_1 = arith.constant 0 : i32
    return %c0_i32, %c0_i32_0 : i32, i32
  }
  func.func @transform_5(%arg0: i32) -> (i32, i32) {
    %c0_i32 = arith.constant 0 : i32
    %c0_i32_0 = arith.constant 0 : i32
    %c0_i32_1 = arith.constant 0 : i32
    return %c0_i32, %c0_i32_0 : i32, i32
  }
  func.func @transform_6(%arg0: i32) -> (i32, i32) {
    %c0_i32 = arith.constant 0 : i32
    %c0_i32_0 = arith.constant 0 : i32
    return %c0_i32, %arg0 : i32, i32
  }
}

</mosaic_0001>

<llo_original>
// kernel: tpu_custom_call.1
$region0: #{tpu_custom_call.1}
  #allocation0 [shape = 'u32[]', space=smem, size = 0x4, offset = 0x4, fixed_abs, tag = 'smem constant byte address 0x4 - core index']
  #allocation1 [shape = 'u32[144,128]{1,0:T(1,128)}', space=vmem, size = 0x12000, scoped, tag = 'internal scratch']
  %s0 = inlined_call_operand.vmem [shape: bf16[12,128], index: 0, kind: input, shape index: {}]
  %s1 = inlined_call_operand.vmem [shape: bf16[8,12], index: 1, kind: input, shape index: {}]
  %s2 = inlined_call_operand.vmem [shape: f32[8,1], index: 2, kind: input, shape index: {}]
  %s3 = inlined_call_operand.vmem [shape: bf16[8,24], index: 3, kind: input, shape index: {}]
  %s4 = inlined_call_operand.vmem [shape: f32[8,1], index: 4, kind: input, shape index: {}]
  %s5 = inlined_call_operand.vmem [shape: bf16[8,12], index: 5, kind: input, shape index: {}]
  %s6 = inlined_call_operand.hbm [shape: f32[8,128], index: 6, kind: output, shape index: {}]
  %s7 = sld [smem:[#allocation0]]
  $region34: #{tpu_custom_call.1} parent=0
    _
  %s9 = ssub.s32 1, %s7
  %s10 = scalar_select 0, %s9, %s7
  $region1: #{tpu_custom_call.1} parent=0
    #allocation2 [shape = 'u8[4096]{0}', space=vmem, size = 0x1000, scoped, tag = 'output window, operand 0, single buffered']
    #allocation3 [shape = 's32[1]{0}', space=sflag, size = 0x4, scoped, tag = 'scoped memory for tpu_custom_call.1']
    %11 = vsyncpa [#allocation3], 0
    // Predicated region
    $region2: #{tpu_custom_call.1} parent=1 // pred_check
      _
    $region3: #{tpu_custom_call.1} parent=1 // pred_check_branch
      %13 = sbr.rel (0) target = $region5
    $region4: #{tpu_custom_call.1} parent=1 // pred_region
      _
    $region5: #{tpu_custom_call.1} parent=1 // pred_fallthru
      _
    // Predicated region
    $region6: #{tpu_custom_call.1} parent=1 // pred_check
      _
    $region7: #{tpu_custom_call.1} parent=1 // pred_check_branch
      %15 = sbr.rel (0) target = $region9
    $region8: #{tpu_custom_call.1} parent=1 // pred_region
      _
    $region9: #{tpu_custom_call.1} parent=1 // pred_fallthru
      _
    // Predicated region
    $region10: #{tpu_custom_call.1} parent=1 // pred_check
      _
    $region11: #{tpu_custom_call.1} parent=1 // pred_check_branch
      %17 = sbr.rel (0) target = $region13
    $region12: #{tpu_custom_call.1} parent=1 // pred_region
      _
    $region13: #{tpu_custom_call.1} parent=1 // pred_fallthru
      _
    // Predicated region
    $region14: #{tpu_custom_call.1} parent=1 // pred_check
      _
    $region15: #{tpu_custom_call.1} parent=1 // pred_check_branch
      %19 = sbr.rel (0) target = $region17
    $region16: #{tpu_custom_call.1} parent=1 // pred_region
      _
    $region17: #{tpu_custom_call.1} parent=1 // pred_fallthru
      _
    // Predicated region
    $region18: #{tpu_custom_call.1} parent=1 // pred_check
      _
    $region19: #{tpu_custom_call.1} parent=1 // pred_check_branch
      %21 = sbr.rel (0) target = $region21
    $region20: #{tpu_custom_call.1} parent=1 // pred_region
      _
    $region21: #{tpu_custom_call.1} parent=1 // pred_fallthru
      _
    // Predicated region
    $region22: #{tpu_custom_call.1} parent=1 // pred_check
      _
    $region23: #{tpu_custom_call.1} parent=1 // pred_check_branch
      %23 = sbr.rel (0) target = $region25
    $region24: #{tpu_custom_call.1} parent=1 // pred_region
      _
    $region25: #{tpu_custom_call.1} parent=1 // pred_fallthru
      _
    %v25 = vlaneseq
    %v26 = vand.u32 %v25, 127
    %vm27 = vcmp.lt.s32.totalorder %v26, 0
    %v28 = vsub.s32 0, %v26
    %v29 = vsel %vm27, %v28, %v26
    %v30 = vshrl.u32 %v29, 3
    %v31 = vand.u32 %v29, 7
    %v32 = vsub.s32 0, %v31
    %v33 = vsel %vm27, %v32, %v31
    %vm34 = vcmp.ne.s32.totalorder %v33, 0
    %vm35 = vcmp.lt.s32.totalorder %v33, 0
    %vm36 = vmand %vm35, %vm34
    %v37 = vadd.s32 %v33, 8
    %v38 = vsel %vm36, %v37, %v33
    %vm39 = vcmp.gt.s32.totalorder %v38, 0
    %v40 = vsel %vm39, 1, 0
    %v41 = vcvt.s32.f32 %v40
    %vm42 = vcmp.lt.s32.totalorder %v38, 7
    %v43 = vsel %vm42, 1, 0
    %v44 = vcvt.s32.f32 %v43
    %v45 = vld [vmem:[%s0] sm:$0xf]
    %v46 = vld [vmem:[%s0 + $0x4] sm:$0x3]
    %v47 = vld [vmem:[%s1] sm:$0xf]
    %v48 = vld [vmem:[%s2] sm:$0xff]
    %50 = vset.pattern.permute.xlu0 0
    %51 = vperm.xlu0 %50, %v48
    %v52 = vpop.permute.xlu0 %51
    %v56 = vunpack.c.l.b16 %v45
    %v57 = vunpack.c.l.b16 %v46
    %v58 = vpack.c.b16 %v57, %v56
    %vm59 = vcmask 97280
    %v61 = vsel %vm59, %v47, 0
    %vm63 = vcmask 1045504
    %v65 = vsel %vm63, %v58, 0
    %67 = vmatprep.subr.bf16.mxu0 0
    %68 = vmatpush1.bf16.msra.mxu0 %v65
    %69 = vmatprep.subr.bf16.mxu0 0
    %70 = vmatpush1.bf16.msra.mxu0 0
    %71 = vmatprep.subr.bf16.mxu0 0
    %72 = vmatpush1.bf16.msra.mxu0 0
    %73 = vmatprep.subr.bf16.mxu0 0
    %74 = vmatpush1.bf16.msra.mxu0 0
    %75 = vmatprep.subr.bf16.mxu0 0
    %76 = vmatpush1.bf16.msra.mxu0 0
    %77 = vmatprep.subr.bf16.mxu0 0
    %78 = vmatpush1.bf16.msra.mxu0 0
    %79 = vmatprep.subr.bf16.mxu0 0
    %80 = vmatpush1.bf16.msra.mxu0 0
    %81 = vmatprep.subr.bf16.mxu0 0
    %82 = vmatpush1.bf16.msra.mxu0 0
    %83 = vmatprep.subr.bf16.mxu0 0
    %84 = vmatpush1.bf16.msra.mxu0 0
    %85 = vmatprep.subr.bf16.mxu0 0
    %86 = vmatpush1.bf16.msra.mxu0 0
    %87 = vmatprep.subr.bf16.mxu0 0
    %88 = vmatpush1.bf16.msra.mxu0 0
    %89 = vmatprep.subr.bf16.mxu0 0
    %90 = vmatpush1.bf16.msra.mxu0 0
    %91 = vmatprep.subr.bf16.mxu0 0
    %92 = vmatpush1.bf16.msra.mxu0 0
    %93 = vmatprep.subr.bf16.mxu0 0
    %94 = vmatpush1.bf16.msra.mxu0 0
    %95 = vmatprep.subr.bf16.mxu0 0
    %96 = vmatpush1.bf16.msra.mxu0 0
    %97 = vmatprep.subr.bf16.mxu0 0
    %98 = vmatpush1.bf16.msra.mxu0 0
    %99 = vmatprep.mubr.bf16.mxu0 0
    %100 = vmatmul.mubr.bf16.gmra.mrb[0].mxu0 %v61
    %v101 = vpop.f32.mrb[0].mxu0
    %v102 = vadd.f32 %v52, %v101
    %v103 = vpop.f32.mrb[0].mxu0
    %v104 = vpop.f32.mrb[0].mxu0
    %v105 = vpop.f32.mrb[0].mxu0
    %106 = vdwg.mxu0
    %v107 = vmax.f32 %v102, 0.0
    %v108 = vld [vmem:[%s3] sm:$0xf]
    %109 = vrot.lane.b32.xlu0 %v107, 1
    %v110 = vpop.permute.xlu0 %109
    %v111 = vmul.f32 %v110, %v41
    %112 = vrot.lane.b32.xlu0 %v107, 127
    %v113 = vpop.permute.xlu0 %112
    %v114 = vmul.f32 %v113, %v44
    %v115 = vpack.c.bf16 %v107, %v111
    %v116 = vpack.c.bf16 %v114, %v114
    %v117 = vld [vmem:[%s4] sm:$0xff]
    %119 = vset.pattern.permute.xlu0 0
    %120 = vperm.xlu0 %119, %v117
    %v121 = vpop.permute.xlu0 %120
    %vm123 = vcmask 195584
    %v125 = vsel %vm123, %v108, 0
    %vm127 = vcmask 1043456
    %v129 = vsel %vm127, %v116, 0
    %131 = vmatprep.subr.bf16.mxu0 0
    %132 = vmatpush1.bf16.msra.mxu0 %v115
    %133 = vmatprep.subr.bf16.mxu0 0
    %134 = vmatpush1.bf16.msra.mxu0 %v129
    %135 = vmatprep.subr.bf16.mxu0 0
    %136 = vmatpush1.bf16.msra.mxu0 0
    %137 = vmatprep.subr.bf16.mxu0 0
    %138 = vmatpush1.bf16.msra.mxu0 0
    %139 = vmatprep.subr.bf16.mxu0 0
    %140 = vmatpush1.bf16.msra.mxu0 0
    %141 = vmatprep.subr.bf16.mxu0 0
    %142 = vmatpush1.bf16.msra.mxu0 0
    %143 = vmatprep.subr.bf16.mxu0 0
    %144 = vmatpush1.bf16.msra.mxu0 0
    %145 = vmatprep.subr.bf16.mxu0 0
    %146 = vmatpush1.bf16.msra.mxu0 0
    %147 = vmatprep.subr.bf16.mxu0 0
    %148 = vmatpush1.bf16.msra.mxu0 0
    %149 = vmatprep.subr.bf16.mxu0 0
    %150 = vmatpush1.bf16.msra.mxu0 0
    %151 = vmatprep.subr.bf16.mxu0 0
    %152 = vmatpush1.bf16.msra.mxu0 0
    %153 = vmatprep.subr.bf16.mxu0 0
    %154 = vmatpush1.bf16.msra.mxu0 0
    %155 = vmatprep.subr.bf16.mxu0 0
    %156 = vmatpush1.bf16.msra.mxu0 0
    %157 = vmatprep.subr.bf16.mxu0 0
    %158 = vmatpush1.bf16.msra.mxu0 0
    %159 = vmatprep.subr.bf16.mxu0 0
    %160 = vmatpush1.bf16.msra.mxu0 0
    %161 = vmatprep.subr.bf16.mxu0 0
    %162 = vmatpush1.bf16.msra.mxu0 0
    %163 = vmatprep.mubr.bf16.mxu0 0
    %164 = vmatmul.mubr.bf16.gmra.mrb[0].mxu0 %v125
    %v165 = vpop.f32.mrb[0].mxu0
    %v166 = vadd.f32 %v121, %v165
    %v167 = vpop.f32.mrb[0].mxu0
    %v168 = vpop.f32.mrb[0].mxu0
    %v169 = vpop.f32.mrb[0].mxu0
    %170 = vdwg.mxu0
    %v171 = vld [vmem:[%s5] sm:$0xf]
    %v173 = vsel %vm59, %v171, 0
    %175 = vmatprep.subr.bf16.mxu0 0
    %176 = vmatpush1.bf16.msra.mxu0 %v65
    %177 = vmatprep.subr.bf16.mxu0 0
    %178 = vmatpush1.bf16.msra.mxu0 0
    %179 = vmatprep.subr.bf16.mxu0 0
    %180 = vmatpush1.bf16.msra.mxu0 0
    %181 = vmatprep.subr.bf16.mxu0 0
    %182 = vmatpush1.bf16.msra.mxu0 0
    %183 = vmatprep.subr.bf16.mxu0 0
    %184 = vmatpush1.bf16.msra.mxu0 0
    %185 = vmatprep.subr.bf16.mxu0 0
    %186 = vmatpush1.bf16.msra.mxu0 0
    %187 = vmatprep.subr.bf16.mxu0 0
    %188 = vmatpush1.bf16.msra.mxu0 0
    %189 = vmatprep.subr.bf16.mxu0 0
    %190 = vmatpush1.bf16.msra.mxu0 0
    %191 = vmatprep.subr.bf16.mxu0 0
    %192 = vmatpush1.bf16.msra.mxu0 0
    %193 = vmatprep.subr.bf16.mxu0 0
    %194 = vmatpush1.bf16.msra.mxu0 0
    %195 = vmatprep.subr.bf16.mxu0 0
    %196 = vmatpush1.bf16.msra.mxu0 0
    %197 = vmatprep.subr.bf16.mxu0 0
    %198 = vmatpush1.bf16.msra.mxu0 0
    %199 = vmatprep.subr.bf16.mxu0 0
    %200 = vmatpush1.bf16.msra.mxu0 0
    %201 = vmatprep.subr.bf16.mxu0 0
    %202 = vmatpush1.bf16.msra.mxu0 0
    %203 = vmatprep.subr.bf16.mxu0 0
    %204 = vmatpush1.bf16.msra.mxu0 0
    %205 = vmatprep.subr.bf16.mxu0 0
    %206 = vmatpush1.bf16.msra.mxu0 0
    %207 = vmatprep.mubr.bf16.mxu0 0
    %208 = vmatmul.mubr.bf16.gmra.mrb[0].mxu0 %v173
    %v209 = vpop.f32.mrb[0].mxu0
    %v210 = vadd.f32 0.0, %v209
    %v211 = vpop.f32.mrb[0].mxu0
    %v212 = vpop.f32.mrb[0].mxu0
    %v213 = vpop.f32.mrb[0].mxu0
    %214 = vdwg.mxu0
    %v215 = vadd.f32 %v166, %v210
    %v216 = vmax.f32 %v215, 0.0
    %217 = vst [vmem:[#allocation2] sm:$0xff] %v216
    // Predicated region
    $region26: #{tpu_custom_call.1} parent=1 // pred_check
      _
    $region27: #{tpu_custom_call.1} parent=1 // pred_check_branch
      %219 = sbr.rel (0) target = $region29
    $region28: #{tpu_custom_call.1} parent=1 // pred_region
      %s221 = ssub.s32 128, 128
      %222 = vsyncadd [#allocation3], %s221
      %s224 = sshll.u32 [#allocation2], 4
      %s225 = int_to_ptr.vmem [resolvable:$true] %s224
      %227 = dma.vmem_to_hbm [thread:$0]  %s225, 128, %s6, [#allocation3]
    $region29: #{tpu_custom_call.1} parent=1 // pred_fallthru
      _
    // Predicated region
    $region30: #{tpu_custom_call.1} parent=1 // pred_check
      _
    $region31: #{tpu_custom_call.1} parent=1 // pred_check_branch
      %229 = sbr.rel (0) target = $region33
    $region32: #{tpu_custom_call.1} parent=1 // pred_region
      %230 = dma.done [#allocation3], 128
    $region33: #{tpu_custom_call.1} parent=1 // pred_fallthru
      _
    %231 = vsyncpa [#allocation3], 1

</llo_original>
